<compile_context>
chip_gen: v7x
topology: tpu7x:2x2x1
jax: 0.10.0
libtpu: 0.0.40
codegen_flags: <defaults>
</compile_context>

<pallas_src>
import functools

import jax
import jax.numpy as jnp
from jax.experimental import pallas as pl
from jax.experimental.pallas import tpu as pltpu

_SLOPE = 0.2          # matches nn.LeakyReLU(0.2) in the reference module
_HEADS_PAD = 64       # packed lane width for [mean | log_var | prob_logit]
_XHAT_PAD = 64        # packed lane width for x_hat
_OUT_SLAB = _HEADS_PAD + _XHAT_PAD   # 128 -> lane-dense output store


def _leaky_relu(x, slope=_SLOPE):
    return jnp.where(x > 0, x, slope * x)


# ------------------------------ fused kernel -------------------------------
def vae_fused_kernel(x_ref, eps_ref,
                     w1_ref, b1_ref, w2_ref, b2_ref,
                     wh_ref, bh_ref,
                     wd1_ref, wp_ref, bd1_ref,
                     wd2_ref, bd2_ref,
                     wo_ref, bo_ref,
                     out_ref, *, latent_dim):
    L = latent_dim
    x = x_ref[...]

    # ---------------- encoder ----------------
    h = _leaky_relu(
        jnp.dot(x, w1_ref[...], preferred_element_type=jnp.float32) + b1_ref[...])
    h = _leaky_relu(
        jnp.dot(h, w2_ref[...], preferred_element_type=jnp.float32) + b2_ref[...])
    # single lane-padded head matmul: cols [0:L]=mean, [L:2L]=log_var, [2L]=logit
    heads = jnp.dot(h, wh_ref[...], preferred_element_type=jnp.float32) + bh_ref[...]
    mean = heads[:, 0:L]
    log_var = heads[:, L:2 * L]
    prob_logit = heads[:, 2 * L:2 * L + 1]

    # -------- reparameterization + decoder --------
    prob = jax.nn.sigmoid(prob_logit)                       # [B, 1]   (EUP)
    z = mean + jnp.exp(0.5 * log_var) * eps_ref[...]        # [B, L]
    # rank-1 prob path on the VPU (broadcast mul); bias d_b1 + d_bp pre-summed
    hd = _leaky_relu(
        jnp.dot(z, wd1_ref[...], preferred_element_type=jnp.float32)
        + prob * wp_ref[...] + bd1_ref[...])
    hd = _leaky_relu(
        jnp.dot(hd, wd2_ref[...], preferred_element_type=jnp.float32) + bd2_ref[...])
    xhat = jax.nn.sigmoid(
        jnp.dot(hd, wo_ref[...], preferred_element_type=jnp.float32) + bo_ref[...])

    # lane-dense [B, 128] output slab
    out_ref[:, 0:_HEADS_PAD] = heads
    out_ref[:, _HEADS_PAD:_OUT_SLAB] = xhat


# --------------------------------- params ----------------------------------
def init_params(key, input_dim, hidden_dim, latent_dim, output_dim):
    def linear(k, fan_in, fan_out):
        kw, kb = jax.random.split(k)
        bound = 1.0 / (fan_in ** 0.5)
        w = jax.random.uniform(kw, (fan_in, fan_out), jnp.float32, -bound, bound)
        b = jax.random.uniform(kb, (1, fan_out), jnp.float32, -bound, bound)
        return w, b

    ks = jax.random.split(key, 9)
    params = {}
    # encoder
    params["e_w1"], params["e_b1"] = linear(ks[0], input_dim, hidden_dim)
    params["e_w2"], params["e_b2"] = linear(ks[1], hidden_dim, hidden_dim)
    params["e_wm"], params["e_bm"] = linear(ks[2], hidden_dim, latent_dim)
    params["e_wv"], params["e_bv"] = linear(ks[3], hidden_dim, latent_dim)
    params["e_wc"], params["e_bc"] = linear(ks[4], hidden_dim, 1)
    # decoder
    params["d_w1"], params["d_b1"] = linear(ks[5], latent_dim, hidden_dim)
    params["d_wp"], params["d_bp"] = linear(ks[6], 1, hidden_dim)
    params["d_w2"], params["d_b2"] = linear(ks[7], hidden_dim, hidden_dim)
    params["d_wo"], params["d_bo"] = linear(ks[8], hidden_dim, output_dim)
    return params


def pack_params(params, latent_dim, output_dim):
    """One-time fusion/padding of weights into the layout the kernel expects."""
    L = latent_dim
    hidden = params["e_w1"].shape[1]
    assert 2 * L + 1 <= _HEADS_PAD, "latent_dim too large for packed head slab"
    assert output_dim <= _XHAT_PAD, "output_dim too large for packed x_hat slab"

    # encoder heads concatenated + lane-padded: [H, 64]
    wh = jnp.zeros((hidden, _HEADS_PAD), jnp.float32)
    wh = wh.at[:, 0:L].set(params["e_wm"])
    wh = wh.at[:, L:2 * L].set(params["e_wv"])
    wh = wh.at[:, 2 * L:2 * L + 1].set(params["e_wc"])
    bh = jnp.zeros((1, _HEADS_PAD), jnp.float32)
    bh = bh.at[:, 0:L].set(params["e_bm"])
    bh = bh.at[:, L:2 * L].set(params["e_bv"])
    bh = bh.at[:, 2 * L:2 * L + 1].set(params["e_bc"])

    # decoder output layer lane-padded: [H, 64]
    wo = jnp.zeros((hidden, _XHAT_PAD), jnp.float32).at[:, 0:output_dim].set(
        params["d_wo"])
    bo = jnp.zeros((1, _XHAT_PAD), jnp.float32).at[:, 0:output_dim].set(
        params["d_bo"])

    # pre-sum the two decoder first-layer biases (lin_1.b + lin_prob.b)
    bd1 = params["d_b1"] + params["d_bp"]

    return (params["e_w1"], params["e_b1"], params["e_w2"], params["e_b2"],
            wh, bh,
            params["d_w1"], params["d_wp"], bd1,
            params["d_w2"], params["d_b2"],
            wo, bo)


# --------------------------------- wrapper ---------------------------------
def vae_forward(x, eps, packed, *, latent_dim, output_dim, block_b=256):
    B, in_dim = x.shape
    L = latent_dim

    # pad batch to a sublane multiple and pick the batch tile
    Bp = ((B + 7) // 8) * 8
    if Bp <= block_b:
        tb = Bp                      # single block, no batch grid loop
    else:
        tb = block_b
        Bp = ((Bp + tb - 1) // tb) * tb
    if Bp != B:
        pad = Bp - B
        x = jnp.pad(x, ((0, pad), (0, 0)))
        eps = jnp.pad(eps, ((0, pad), (0, 0)))

    grid = (Bp // tb,)

    def row_spec(cols):
        # batch-tiled activations / outputs
        return pl.BlockSpec((tb, cols), lambda i: (i, 0))

    def const_spec(arr):
        # weights: same block every grid step -> stays resident in VMEM
        return pl.BlockSpec(arr.shape, lambda i: (0, 0))

    in_specs = [row_spec(in_dim), row_spec(L)] + [const_spec(p) for p in packed]

    out = pl.pallas_call(
        functools.partial(vae_fused_kernel, latent_dim=latent_dim),
        out_shape=jax.ShapeDtypeStruct((Bp, _OUT_SLAB), jnp.float32),
        grid=grid,
        in_specs=in_specs,
        out_specs=row_spec(_OUT_SLAB),
        compiler_params=pltpu.CompilerParams(
            dimension_semantics=("parallel",)),
    )(x, eps, *packed)

    mean = out[:B, 0:L]
    log_var = out[:B, L:2 * L]
    prob_logit = out[:B, 2 * L:2 * L + 1]
    x_hat = out[:B, _HEADS_PAD:_HEADS_PAD + output_dim]
    return x_hat, mean, log_var, prob_logit


if __name__ == "__main__":
    # small shapes consistent with the module
    batch, input_dim, hidden_dim, latent_dim = 8, 32, 32, 16
    output_dim = input_dim

    key = jax.random.PRNGKey(0)
    k_params, k_x, k_eps = jax.random.split(key, 3)

    params = init_params(k_params, input_dim, hidden_dim, latent_dim, output_dim)
    packed = pack_params(params, latent_dim, output_dim)  # one-time, outside jit

    x = jax.random.normal(k_x, (batch, input_dim), jnp.float32)
    # epsilon ~ N(0,1) (torch.randn_like) drawn outside the kernel so the
    # kernel is deterministic given its inputs.
    eps = jax.random.normal(k_eps, (batch, latent_dim), jnp.float32)

    fwd = jax.jit(functools.partial(vae_forward,
                                    latent_dim=latent_dim, output_dim=output_dim))
    x_hat, mean, log_var, prob_logit = fwd(x, eps, packed)
    jax.block_until_ready((x_hat, mean, log_var, prob_logit))

    assert x_hat.shape == (batch, output_dim)
    assert mean.shape == (batch, latent_dim)
    assert log_var.shape == (batch, latent_dim)
    assert prob_logit.shape == (batch, 1)
    print("KERNEL_OK")
</pallas_src>

<mosaic_0001>
module attributes {stable_mosaic.version = 11 : i64} {
  func.func @vae_fused_kernel(%arg0: i32, %arg1: memref<8x32xf32, #tpu.memory_space<vmem>>, %arg2: memref<8x16xf32, #tpu.memory_space<vmem>>, %arg3: memref<32x32xf32, #tpu.memory_space<vmem>>, %arg4: memref<1x32xf32, #tpu.memory_space<vmem>>, %arg5: memref<32x32xf32, #tpu.memory_space<vmem>>, %arg6: memref<1x32xf32, #tpu.memory_space<vmem>>, %arg7: memref<32x64xf32, #tpu.memory_space<vmem>>, %arg8: memref<1x64xf32, #tpu.memory_space<vmem>>, %arg9: memref<16x32xf32, #tpu.memory_space<vmem>>, %arg10: memref<1x32xf32, #tpu.memory_space<vmem>>, %arg11: memref<1x32xf32, #tpu.memory_space<vmem>>, %arg12: memref<32x32xf32, #tpu.memory_space<vmem>>, %arg13: memref<1x32xf32, #tpu.memory_space<vmem>>, %arg14: memref<32x64xf32, #tpu.memory_space<vmem>>, %arg15: memref<1x64xf32, #tpu.memory_space<vmem>>, %arg16: memref<8x128xf32, #tpu.memory_space<vmem>>) attributes {dimension_semantics = [#tpu.dimension_semantics<parallel>], iteration_bounds = array<i64: 1>, scalar_prefetch = 0 : i64, scratch_operands = 0 : i64, tpu.core_type = #tpu.core_type<tc>, window_params = [{transform_indices = @transform_0, window_bounds = array<i64: 8, 32>}, {transform_indices = @transform_1, window_bounds = array<i64: 8, 16>}, {pipeline_mode = #tpu.pipeline_mode<synchronous>, transform_indices = @transform_2, window_bounds = array<i64: 32, 32>}, {pipeline_mode = #tpu.pipeline_mode<synchronous>, transform_indices = @transform_3, window_bounds = array<i64: 1, 32>}, {pipeline_mode = #tpu.pipeline_mode<synchronous>, transform_indices = @transform_4, window_bounds = array<i64: 32, 32>}, {pipeline_mode = #tpu.pipeline_mode<synchronous>, transform_indices = @transform_5, window_bounds = array<i64: 1, 32>}, {pipeline_mode = #tpu.pipeline_mode<synchronous>, transform_indices = @transform_6, window_bounds = array<i64: 32, 64>}, {pipeline_mode = #tpu.pipeline_mode<synchronous>, transform_indices = @transform_7, window_bounds = array<i64: 1, 64>}, {pipeline_mode = #tpu.pipeline_mode<synchronous>, transform_indices = @transform_8, window_bounds = array<i64: 16, 32>}, {pipeline_mode = #tpu.pipeline_mode<synchronous>, transform_indices = @transform_9, window_bounds = array<i64: 1, 32>}, {pipeline_mode = #tpu.pipeline_mode<synchronous>, transform_indices = @transform_10, window_bounds = array<i64: 1, 32>}, {pipeline_mode = #tpu.pipeline_mode<synchronous>, transform_indices = @transform_11, window_bounds = array<i64: 32, 32>}, {pipeline_mode = #tpu.pipeline_mode<synchronous>, transform_indices = @transform_12, window_bounds = array<i64: 1, 32>}, {pipeline_mode = #tpu.pipeline_mode<synchronous>, transform_indices = @transform_13, window_bounds = array<i64: 32, 64>}, {pipeline_mode = #tpu.pipeline_mode<synchronous>, transform_indices = @transform_14, window_bounds = array<i64: 1, 64>}, {transform_indices = @transform_15, window_bounds = array<i64: 8, 128>}]} {
    %c0 = arith.constant 0 : index
    %c0_0 = arith.constant 0 : index
    %0 = vector.load %arg1[%c0, %c0_0] : memref<8x32xf32, #tpu.memory_space<vmem>>, vector<8x32xf32>
    %c0_1 = arith.constant 0 : index
    %c0_2 = arith.constant 0 : index
    %1 = vector.load %arg3[%c0_1, %c0_2] : memref<32x32xf32, #tpu.memory_space<vmem>>, vector<32x32xf32>
    %cst = arith.constant dense<0.000000e+00> : vector<8x32xf32>
    %2 = tpu.matmul %0, %1, %cst {dimension_numbers = #tpu.dot_dimension_numbers<[1], [0], [0], [1], [0, 0, 1, 1], [], []>} : vector<8x32xf32>, vector<32x32xf32>, vector<8x32xf32> -> vector<8x32xf32>
    %c0_3 = arith.constant 0 : index
    %c0_4 = arith.constant 0 : index
    %3 = vector.load %arg4[%c0_3, %c0_4] : memref<1x32xf32, #tpu.memory_space<vmem>>, vector<1x32xf32>
    %4 = vector.broadcast %3 : vector<1x32xf32> to vector<8x32xf32>
    %5 = arith.addf %2, %4 : vector<8x32xf32>
    %cst_5 = arith.constant 0.000000e+00 : f32
    %6 = vector.broadcast %cst_5 : f32 to vector<8x32xf32>
    %7 = arith.cmpf ogt, %5, %6 : vector<8x32xf32>
    %cst_6 = arith.constant 2.000000e-01 : f32
    %8 = vector.broadcast %cst_6 : f32 to vector<8x32xf32>
    %9 = arith.mulf %8, %5 : vector<8x32xf32>
    %10 = arith.select %7, %5, %9 : vector<8x32xi1>, vector<8x32xf32>
    %c0_7 = arith.constant 0 : index
    %c0_8 = arith.constant 0 : index
    %11 = vector.load %arg5[%c0_7, %c0_8] : memref<32x32xf32, #tpu.memory_space<vmem>>, vector<32x32xf32>
    %cst_9 = arith.constant dense<0.000000e+00> : vector<8x32xf32>
    %12 = tpu.matmul %10, %11, %cst_9 {dimension_numbers = #tpu.dot_dimension_numbers<[1], [0], [0], [1], [0, 0, 1, 1], [], []>} : vector<8x32xf32>, vector<32x32xf32>, vector<8x32xf32> -> vector<8x32xf32>
    %c0_10 = arith.constant 0 : index
    %c0_11 = arith.constant 0 : index
    %13 = vector.load %arg6[%c0_10, %c0_11] : memref<1x32xf32, #tpu.memory_space<vmem>>, vector<1x32xf32>
    %14 = vector.broadcast %13 : vector<1x32xf32> to vector<8x32xf32>
    %15 = arith.addf %12, %14 : vector<8x32xf32>
    %cst_12 = arith.constant 0.000000e+00 : f32
    %16 = vector.broadcast %cst_12 : f32 to vector<8x32xf32>
    %17 = arith.cmpf ogt, %15, %16 : vector<8x32xf32>
    %cst_13 = arith.constant 2.000000e-01 : f32
    %18 = vector.broadcast %cst_13 : f32 to vector<8x32xf32>
    %19 = arith.mulf %18, %15 : vector<8x32xf32>
    %20 = arith.select %17, %15, %19 : vector<8x32xi1>, vector<8x32xf32>
    %c0_14 = arith.constant 0 : index
    %c0_15 = arith.constant 0 : index
    %21 = vector.load %arg7[%c0_14, %c0_15] : memref<32x64xf32, #tpu.memory_space<vmem>>, vector<32x64xf32>
    %cst_16 = arith.constant dense<0.000000e+00> : vector<8x64xf32>
    %22 = tpu.matmul %20, %21, %cst_16 {dimension_numbers = #tpu.dot_dimension_numbers<[1], [0], [0], [1], [0, 0, 1, 1], [], []>} : vector<8x32xf32>, vector<32x64xf32>, vector<8x64xf32> -> vector<8x64xf32>
    %c0_17 = arith.constant 0 : index
    %c0_18 = arith.constant 0 : index
    %23 = vector.load %arg8[%c0_17, %c0_18] : memref<1x64xf32, #tpu.memory_space<vmem>>, vector<1x64xf32>
    %24 = vector.broadcast %23 : vector<1x64xf32> to vector<8x64xf32>
    %25 = arith.addf %22, %24 : vector<8x64xf32>
    %26 = vector.extract_strided_slice %25 {offsets = [0, 0], sizes = [8, 16], strides = [1, 1]} : vector<8x64xf32> to vector<8x16xf32>
    %27 = vector.extract_strided_slice %25 {offsets = [0, 16], sizes = [8, 16], strides = [1, 1]} : vector<8x64xf32> to vector<8x16xf32>
    %28 = vector.extract_strided_slice %25 {offsets = [0, 32], sizes = [8, 1], strides = [1, 1]} : vector<8x64xf32> to vector<8x1xf32>
    %29 = arith.negf %28 : vector<8x1xf32>
    %30 = math.exp %29 : vector<8x1xf32>
    %cst_19 = arith.constant 1.000000e+00 : f32
    %31 = vector.broadcast %cst_19 : f32 to vector<8x1xf32>
    %32 = arith.addf %31, %30 : vector<8x1xf32>
    %33 = arith.divf %31, %32 : vector<8x1xf32>
    %cst_20 = arith.constant 5.000000e-01 : f32
    %34 = vector.broadcast %cst_20 : f32 to vector<8x16xf32>
    %35 = arith.mulf %34, %27 : vector<8x16xf32>
    %36 = math.exp %35 : vector<8x16xf32>
    %c0_21 = arith.constant 0 : index
    %c0_22 = arith.constant 0 : index
    %37 = vector.load %arg2[%c0_21, %c0_22] : memref<8x16xf32, #tpu.memory_space<vmem>>, vector<8x16xf32>
    %38 = arith.mulf %36, %37 : vector<8x16xf32>
    %39 = arith.addf %26, %38 : vector<8x16xf32>
    %c0_23 = arith.constant 0 : index
    %c0_24 = arith.constant 0 : index
    %40 = vector.load %arg9[%c0_23, %c0_24] : memref<16x32xf32, #tpu.memory_space<vmem>>, vector<16x32xf32>
    %cst_25 = arith.constant dense<0.000000e+00> : vector<8x32xf32>
    %41 = tpu.matmul %39, %40, %cst_25 {dimension_numbers = #tpu.dot_dimension_numbers<[1], [0], [0], [1], [0, 0, 1, 1], [], []>} : vector<8x16xf32>, vector<16x32xf32>, vector<8x32xf32> -> vector<8x32xf32>
    %c0_26 = arith.constant 0 : index
    %c0_27 = arith.constant 0 : index
    %42 = vector.load %arg10[%c0_26, %c0_27] : memref<1x32xf32, #tpu.memory_space<vmem>>, vector<1x32xf32>
    %43 = vector.broadcast %33 : vector<8x1xf32> to vector<8x32xf32>
    %44 = vector.broadcast %42 : vector<1x32xf32> to vector<8x32xf32>
    %45 = arith.mulf %43, %44 : vector<8x32xf32>
    %46 = arith.addf %41, %45 : vector<8x32xf32>
    %c0_28 = arith.constant 0 : index
    %c0_29 = arith.constant 0 : index
    %47 = vector.load %arg11[%c0_28, %c0_29] : memref<1x32xf32, #tpu.memory_space<vmem>>, vector<1x32xf32>
    %48 = vector.broadcast %47 : vector<1x32xf32> to vector<8x32xf32>
    %49 = arith.addf %46, %48 : vector<8x32xf32>
    %cst_30 = arith.constant 0.000000e+00 : f32
    %50 = vector.broadcast %cst_30 : f32 to vector<8x32xf32>
    %51 = arith.cmpf ogt, %49, %50 : vector<8x32xf32>
    %cst_31 = arith.constant 2.000000e-01 : f32
    %52 = vector.broadcast %cst_31 : f32 to vector<8x32xf32>
    %53 = arith.mulf %52, %49 : vector<8x32xf32>
    %54 = arith.select %51, %49, %53 : vector<8x32xi1>, vector<8x32xf32>
    %c0_32 = arith.constant 0 : index
    %c0_33 = arith.constant 0 : index
    %55 = vector.load %arg12[%c0_32, %c0_33] : memref<32x32xf32, #tpu.memory_space<vmem>>, vector<32x32xf32>
    %cst_34 = arith.constant dense<0.000000e+00> : vector<8x32xf32>
    %56 = tpu.matmul %54, %55, %cst_34 {dimension_numbers = #tpu.dot_dimension_numbers<[1], [0], [0], [1], [0, 0, 1, 1], [], []>} : vector<8x32xf32>, vector<32x32xf32>, vector<8x32xf32> -> vector<8x32xf32>
    %c0_35 = arith.constant 0 : index
    %c0_36 = arith.constant 0 : index
    %57 = vector.load %arg13[%c0_35, %c0_36] : memref<1x32xf32, #tpu.memory_space<vmem>>, vector<1x32xf32>
    %58 = vector.broadcast %57 : vector<1x32xf32> to vector<8x32xf32>
    %59 = arith.addf %56, %58 : vector<8x32xf32>
    %cst_37 = arith.constant 0.000000e+00 : f32
    %60 = vector.broadcast %cst_37 : f32 to vector<8x32xf32>
    %61 = arith.cmpf ogt, %59, %60 : vector<8x32xf32>
    %cst_38 = arith.constant 2.000000e-01 : f32
    %62 = vector.broadcast %cst_38 : f32 to vector<8x32xf32>
    %63 = arith.mulf %62, %59 : vector<8x32xf32>
    %64 = arith.select %61, %59, %63 : vector<8x32xi1>, vector<8x32xf32>
    %c0_39 = arith.constant 0 : index
    %c0_40 = arith.constant 0 : index
    %65 = vector.load %arg14[%c0_39, %c0_40] : memref<32x64xf32, #tpu.memory_space<vmem>>, vector<32x64xf32>
    %cst_41 = arith.constant dense<0.000000e+00> : vector<8x64xf32>
    %66 = tpu.matmul %64, %65, %cst_41 {dimension_numbers = #tpu.dot_dimension_numbers<[1], [0], [0], [1], [0, 0, 1, 1], [], []>} : vector<8x32xf32>, vector<32x64xf32>, vector<8x64xf32> -> vector<8x64xf32>
    %c0_42 = arith.constant 0 : index
    %c0_43 = arith.constant 0 : index
    %67 = vector.load %arg15[%c0_42, %c0_43] : memref<1x64xf32, #tpu.memory_space<vmem>>, vector<1x64xf32>
    %68 = vector.broadcast %67 : vector<1x64xf32> to vector<8x64xf32>
    %69 = arith.addf %66, %68 : vector<8x64xf32>
    %70 = arith.negf %69 : vector<8x64xf32>
    %71 = math.exp %70 : vector<8x64xf32>
    %cst_44 = arith.constant 1.000000e+00 : f32
    %72 = vector.broadcast %cst_44 : f32 to vector<8x64xf32>
    %73 = arith.addf %72, %71 : vector<8x64xf32>
    %74 = arith.divf %72, %73 : vector<8x64xf32>
    %c0_45 = arith.constant 0 : index
    %c0_46 = arith.constant 0 : index
    %75 = vector.load %arg16[%c0_45, %c0_46] : memref<8x128xf32, #tpu.memory_space<vmem>>, vector<8x64xf32>
    tpu.vector_store %arg16[%c0_45, %c0_46], %25 {strides = array<i32>} : memref<8x128xf32, #tpu.memory_space<vmem>>, vector<8x64xf32>,
    %c0_47 = arith.constant 0 : index
    %c64 = arith.constant 64 : index
    %76 = vector.load %arg16[%c0_47, %c64] : memref<8x128xf32, #tpu.memory_space<vmem>>, vector<8x64xf32>
    tpu.vector_store %arg16[%c0_47, %c64], %74 {strides = array<i32>} : memref<8x128xf32, #tpu.memory_space<vmem>>, vector<8x64xf32>,
    return
  }
  func.func @transform_0(%arg0: i32) -> (i32, i32) {
    %c0_i32 = arith.constant 0 : i32
    %c0_i32_0 = arith.constant 0 : i32
    return %arg0, %c0_i32 : i32, i32
  }
  func.func @transform_1(%arg0: i32) -> (i32, i32) {
    %c0_i32 = arith.constant 0 : i32
    %c0_i32_0 = arith.constant 0 : i32
    return %arg0, %c0_i32 : i32, i32
  }
  func.func @transform_2(%arg0: i32) -> (i32, i32) {
    %c0_i32 = arith.constant 0 : i32
    %c0_i32_0 = arith.constant 0 : i32
    %c0_i32_1 = arith.constant 0 : i32
    return %c0_i32, %c0_i32_0 : i32, i32
  }
  func.func @transform_3(%arg0: i32) -> (i32, i32) {
    %c0_i32 = arith.constant 0 : i32
    %c0_i32_0 = arith.constant 0 : i32
    %c0_i32_1 = arith.constant 0 : i32
    return %c0_i32, %c0_i32_0 : i32, i32
  }
  func.func @transform_4(%arg0: i32) -> (i32, i32) {
    %c0_i32 = arith.constant 0 : i32
    %c0_i32_0 = arith.constant 0 : i32
    %c0_i32_1 = arith.constant 0 : i32
    return %c0_i32, %c0_i32_0 : i32, i32
  }
  func.func @transform_5(%arg0: i32) -> (i32, i32) {
    %c0_i32 = arith.constant 0 : i32
    %c0_i32_0 = arith.constant 0 : i32
    %c0_i32_1 = arith.constant 0 : i32
    return %c0_i32, %c0_i32_0 : i32, i32
  }
  func.func @transform_6(%arg0: i32) -> (i32, i32) {
    %c0_i32 = arith.constant 0 : i32
    %c0_i32_0 = arith.constant 0 : i32
    %c0_i32_1 = arith.constant 0 : i32
    return %c0_i32, %c0_i32_0 : i32, i32
  }
  func.func @transform_7(%arg0: i32) -> (i32, i32) {
    %c0_i32 = arith.constant 0 : i32
    %c0_i32_0 = arith.constant 0 : i32
    %c0_i32_1 = arith.constant 0 : i32
    return %c0_i32, %c0_i32_0 : i32, i32
  }
  func.func @transform_8(%arg0: i32) -> (i32, i32) {
    %c0_i32 = arith.constant 0 : i32
    %c0_i32_0 = arith.constant 0 : i32
    %c0_i32_1 = arith.constant 0 : i32
    return %c0_i32, %c0_i32_0 : i32, i32
  }
  func.func @transform_9(%arg0: i32) -> (i32, i32) {
    %c0_i32 = arith.constant 0 : i32
    %c0_i32_0 = arith.constant 0 : i32
    %c0_i32_1 = arith.constant 0 : i32
    return %c0_i32, %c0_i32_0 : i32, i32
  }
  func.func @transform_10(%arg0: i32) -> (i32, i32) {
    %c0_i32 = arith.constant 0 : i32
    %c0_i32_0 = arith.constant 0 : i32
    %c0_i32_1 = arith.constant 0 : i32
    return %c0_i32, %c0_i32_0 : i32, i32
  }
  func.func @transform_11(%arg0: i32) -> (i32, i32) {
    %c0_i32 = arith.constant 0 : i32
    %c0_i32_0 = arith.constant 0 : i32
    %c0_i32_1 = arith.constant 0 : i32
    return %c0_i32, %c0_i32_0 : i32, i32
  }
  func.func @transform_12(%arg0: i32) -> (i32, i32) {
    %c0_i32 = arith.constant 0 : i32
    %c0_i32_0 = arith.constant 0 : i32
    %c0_i32_1 = arith.constant 0 : i32
    return %c0_i32, %c0_i32_0 : i32, i32
  }
  func.func @transform_13(%arg0: i32) -> (i32, i32) {
    %c0_i32 = arith.constant 0 : i32
    %c0_i32_0 = arith.constant 0 : i32
    %c0_i32_1 = arith.constant 0 : i32
    return %c0_i32, %c0_i32_0 : i32, i32
  }
  func.func @transform_14(%arg0: i32) -> (i32, i32) {
    %c0_i32 = arith.constant 0 : i32
    %c0_i32_0 = arith.constant 0 : i32
    %c0_i32_1 = arith.constant 0 : i32
    return %c0_i32, %c0_i32_0 : i32, i32
  }
  func.func @transform_15(%arg0: i32) -> (i32, i32) {
    %c0_i32 = arith.constant 0 : i32
    %c0_i32_0 = arith.constant 0 : i32
    return %arg0, %c0_i32 : i32, i32
  }
}

</mosaic_0001>

<llo_original>
// kernel: vae_forward.1
$region0: #{vae_forward.1}
  #allocation0 [shape = 'u32[]', space=smem, size = 0x4, offset = 0x4, fixed_abs, tag = 'smem constant byte address 0x4 - core index']
  #allocation1 [shape = 'u32[144,128]{1,0:T(1,128)}', space=vmem, size = 0x12000, scoped, tag = 'internal scratch']
  %s0 = inlined_call_operand.hbm [shape: f32[8,32], index: 0, kind: input, shape index: {}]
  %s1 = inlined_call_operand.vmem [shape: f32[8,16], index: 1, kind: input, shape index: {}]
  %s2 = inlined_call_operand.vmem [shape: f32[32,32], index: 2, kind: input, shape index: {}]
  %s3 = inlined_call_operand.vmem [shape: f32[1,32], index: 3, kind: input, shape index: {}]
  %s4 = inlined_call_operand.hbm [shape: f32[32,32], index: 4, kind: input, shape index: {}]
  %s5 = inlined_call_operand.vmem [shape: f32[1,32], index: 5, kind: input, shape index: {}]
  %s6 = inlined_call_operand.hbm [shape: f32[32,64], index: 6, kind: input, shape index: {}]
  %s7 = inlined_call_operand.vmem [shape: f32[1,64], index: 7, kind: input, shape index: {}]
  %s8 = inlined_call_operand.hbm [shape: f32[16,32], index: 8, kind: input, shape index: {}]
  %s9 = inlined_call_operand.vmem [shape: f32[1,32], index: 9, kind: input, shape index: {}]
  %s10 = inlined_call_operand.vmem [shape: f32[1,32], index: 10, kind: input, shape index: {}]
  %s11 = inlined_call_operand.hbm [shape: f32[32,32], index: 11, kind: input, shape index: {}]
  %s12 = inlined_call_operand.vmem [shape: f32[1,32], index: 12, kind: input, shape index: {}]
  %s13 = inlined_call_operand.hbm [shape: f32[32,64], index: 13, kind: input, shape index: {}]
  %s14 = inlined_call_operand.vmem [shape: f32[1,64], index: 14, kind: input, shape index: {}]
  %s15 = inlined_call_operand.vmem [shape: f32[8,128], index: 15, kind: output, shape index: {}]
  %s16 = sld [smem:[#allocation0]]
  $region94: #{vae_forward.1} parent=0
    _
  %s18 = ssub.s32 1, %s16
  %s19 = scalar_select 0, %s18, %s16
  $region1: #{vae_forward.1} parent=0
    #allocation2 [shape = 'u8[4096]{0}', space=vmem, size = 0x1000, scoped, tag = 'input window, operand 0, single buffered']
    #allocation3 [shape = 's32[1]{0}', space=sflag, size = 0x4, scoped, tag = 'scoped memory for vae_forward.1']
    #allocation4 [shape = 'u8[16384]{0}', space=vmem, size = 0x4000, scoped, tag = 'input window, operand 4, single buffered']
    #allocation5 [shape = 's32[1]{0}', space=sflag, size = 0x4, scoped, tag = 'scoped memory for vae_forward.1']
    #allocation6 [shape = 'u8[16384]{0}', space=vmem, size = 0x4000, scoped, tag = 'input window, operand 6, single buffered']
    #allocation7 [shape = 'u8[8192]{0}', space=vmem, size = 0x2000, scoped, tag = 'input window, operand 8, single buffered']
    #allocation8 [shape = 's32[1]{0}', space=sflag, size = 0x4, scoped, tag = 'scoped memory for vae_forward.1']
    #allocation9 [shape = 'u8[16384]{0}', space=vmem, size = 0x4000, scoped, tag = 'input window, operand 11, single buffered']
    #allocation10 [shape = 'u8[16384]{0}', space=vmem, size = 0x4000, scoped, tag = 'input window, operand 13, single buffered']
    #allocation11 [shape = 's32[1]{0}', space=sflag, size = 0x4, scoped, tag = 'scoped memory for vae_forward.1']
    %20 = vsyncpa [#allocation3], 0
    %21 = vsyncpa [#allocation5], 0
    %22 = vsyncpa [#allocation8], 0
    %23 = vsyncpa [#allocation11], 0
    // Predicated region
    $region2: #{vae_forward.1} parent=1 // pred_check
      _
    $region3: #{vae_forward.1} parent=1 // pred_check_branch
      %25 = sbr.rel (0) target = $region5
    $region4: #{vae_forward.1} parent=1 // pred_region
      %s27 = ssub.s32 128, 128
      %28 = vsyncadd [#allocation3], %s27
      %s30 = sshll.u32 [#allocation2], 4
      %s31 = int_to_ptr.vmem [resolvable:$true] %s30
      %33 = dma.hbm_to_vmem [thread:$0]  %s0, 128, %s31, [#allocation3]
    $region5: #{vae_forward.1} parent=1 // pred_fallthru
      _
    // Predicated region
    $region6: #{vae_forward.1} parent=1 // pred_check
      _
    $region7: #{vae_forward.1} parent=1 // pred_check_branch
      %35 = sbr.rel (0) target = $region9
    $region8: #{vae_forward.1} parent=1 // pred_region
      _
    $region9: #{vae_forward.1} parent=1 // pred_fallthru
      _
    // Predicated region
    $region10: #{vae_forward.1} parent=1 // pred_check
      _
    $region11: #{vae_forward.1} parent=1 // pred_check_branch
      %37 = sbr.rel (0) target = $region13
    $region12: #{vae_forward.1} parent=1 // pred_region
      _
    $region13: #{vae_forward.1} parent=1 // pred_fallthru
      _
    // Predicated region
    $region14: #{vae_forward.1} parent=1 // pred_check
      _
    $region15: #{vae_forward.1} parent=1 // pred_check_branch
      %39 = sbr.rel (0) target = $region17
    $region16: #{vae_forward.1} parent=1 // pred_region
      _
    $region17: #{vae_forward.1} parent=1 // pred_fallthru
      _
    // Predicated region
    $region18: #{vae_forward.1} parent=1 // pred_check
      _
    $region19: #{vae_forward.1} parent=1 // pred_check_branch
      %41 = sbr.rel (0) target = $region21
    $region20: #{vae_forward.1} parent=1 // pred_region
      %s43 = ssub.s32 512, 512
      %44 = vsyncadd [#allocation5], %s43
      %s45 = sshll.u32 [#allocation4], 4
      %s46 = int_to_ptr.vmem [resolvable:$true] %s45
      %51 = dma.hbm_to_vmem [thread:$0]  %s4, 512, %s46, [#allocation5], 128, 128, 8
    $region21: #{vae_forward.1} parent=1 // pred_fallthru
      _
    // Predicated region
    $region22: #{vae_forward.1} parent=1 // pred_check
      _
    $region23: #{vae_forward.1} parent=1 // pred_check_branch
      %53 = sbr.rel (0) target = $region25
    $region24: #{vae_forward.1} parent=1 // pred_region
      _
    $region25: #{vae_forward.1} parent=1 // pred_fallthru
      _
    // Predicated region
    $region26: #{vae_forward.1} parent=1 // pred_check
      _
    $region27: #{vae_forward.1} parent=1 // pred_check_branch
      %55 = sbr.rel (0) target = $region29
    $region28: #{vae_forward.1} parent=1 // pred_region
      %s57 = ssub.s32 512, 512
      %58 = vsyncadd [#allocation5], %s57
      %s59 = sshll.u32 [#allocation6], 4
      %s60 = int_to_ptr.vmem [resolvable:$true] %s59
      %65 = dma.hbm_to_vmem [thread:$0]  %s6, 512, %s60, [#allocation5], 128, 128, 8
    $region29: #{vae_forward.1} parent=1 // pred_fallthru
      _
    // Predicated region
    $region30: #{vae_forward.1} parent=1 // pred_check
      _
    $region31: #{vae_forward.1} parent=1 // pred_check_branch
      %67 = sbr.rel (0) target = $region33
    $region32: #{vae_forward.1} parent=1 // pred_region
      _
    $region33: #{vae_forward.1} parent=1 // pred_fallthru
      _
    // Predicated region
    $region34: #{vae_forward.1} parent=1 // pred_check
      _
    $region35: #{vae_forward.1} parent=1 // pred_check_branch
      %69 = sbr.rel (0) target = $region37
    $region36: #{vae_forward.1} parent=1 // pred_region
      %s71 = ssub.s32 256, 256
      %72 = vsyncadd [#allocation8], %s71
      %s73 = sshll.u32 [#allocation7], 4
      %s74 = int_to_ptr.vmem [resolvable:$true] %s73
      %79 = dma.hbm_to_vmem [thread:$0]  %s8, 256, %s74, [#allocation8], 128, 128, 8
    $region37: #{vae_forward.1} parent=1 // pred_fallthru
      _
    // Predicated region
    $region38: #{vae_forward.1} parent=1 // pred_check
      _
    $region39: #{vae_forward.1} parent=1 // pred_check_branch
      %81 = sbr.rel (0) target = $region41
    $region40: #{vae_forward.1} parent=1 // pred_region
      _
    $region41: #{vae_forward.1} parent=1 // pred_fallthru
      _
    // Predicated region
    $region42: #{vae_forward.1} parent=1 // pred_check
      _
    $region43: #{vae_forward.1} parent=1 // pred_check_branch
      %83 = sbr.rel (0) target = $region45
    $region44: #{vae_forward.1} parent=1 // pred_region
      _
    $region45: #{vae_forward.1} parent=1 // pred_fallthru
      _
    // Predicated region
    $region46: #{vae_forward.1} parent=1 // pred_check
      _
    $region47: #{vae_forward.1} parent=1 // pred_check_branch
      %85 = sbr.rel (0) target = $region49
    $region48: #{vae_forward.1} parent=1 // pred_region
      %s87 = ssub.s32 512, 512
      %88 = vsyncadd [#allocation8], %s87
      %s89 = sshll.u32 [#allocation9], 4
      %s90 = int_to_ptr.vmem [resolvable:$true] %s89
      %95 = dma.hbm_to_vmem [thread:$0]  %s11, 512, %s90, [#allocation8], 128, 128, 8
    $region49: #{vae_forward.1} parent=1 // pred_fallthru
      _
    // Predicated region
    $region50: #{vae_forward.1} parent=1 // pred_check
      _
    $region51: #{vae_forward.1} parent=1 // pred_check_branch
      %97 = sbr.rel (0) target = $region53
    $region52: #{vae_forward.1} parent=1 // pred_region
      _
    $region53: #{vae_forward.1} parent=1 // pred_fallthru
      _
    // Predicated region
    $region54: #{vae_forward.1} parent=1 // pred_check
      _
    $region55: #{vae_forward.1} parent=1 // pred_check_branch
      %99 = sbr.rel (0) target = $region57
    $region56: #{vae_forward.1} parent=1 // pred_region
      %s101 = ssub.s32 512, 512
      %102 = vsyncadd [#allocation11], %s101
      %s103 = sshll.u32 [#allocation10], 4
      %s104 = int_to_ptr.vmem [resolvable:$true] %s103
      %109 = dma.hbm_to_vmem [thread:$0]  %s13, 512, %s104, [#allocation11], 128, 128, 8
    $region57: #{vae_forward.1} parent=1 // pred_fallthru
      _
    // Predicated region
    $region58: #{vae_forward.1} parent=1 // pred_check
      _
    $region59: #{vae_forward.1} parent=1 // pred_check_branch
      %111 = sbr.rel (0) target = $region61
    $region60: #{vae_forward.1} parent=1 // pred_region
      _
    $region61: #{vae_forward.1} parent=1 // pred_fallthru
      _
    // Predicated region
    $region62: #{vae_forward.1} parent=1 // pred_check
      _
    $region63: #{vae_forward.1} parent=1 // pred_check_branch
      %113 = sbr.rel (0) target = $region65
    $region64: #{vae_forward.1} parent=1 // pred_region
      %114 = dma.done [#allocation3], 128
    $region65: #{vae_forward.1} parent=1 // pred_fallthru
      _
    // Predicated region
    $region66: #{vae_forward.1} parent=1 // pred_check
      _
    $region67: #{vae_forward.1} parent=1 // pred_check_branch
      %116 = sbr.rel (0) target = $region69
    $region68: #{vae_forward.1} parent=1 // pred_region
      %117 = dma.done [#allocation5], 512
    $region69: #{vae_forward.1} parent=1 // pred_fallthru
      _
    // Predicated region
    $region70: #{vae_forward.1} parent=1 // pred_check
      _
    $region71: #{vae_forward.1} parent=1 // pred_check_branch
      %119 = sbr.rel (0) target = $region73
    $region72: #{vae_forward.1} parent=1 // pred_region
      %120 = dma.done [#allocation5], 512
    $region73: #{vae_forward.1} parent=1 // pred_fallthru
      _
    // Predicated region
    $region74: #{vae_forward.1} parent=1 // pred_check
      _
    $region75: #{vae_forward.1} parent=1 // pred_check_branch
      %122 = sbr.rel (0) target = $region77
    $region76: #{vae_forward.1} parent=1 // pred_region
      %123 = dma.done [#allocation8], 256
    $region77: #{vae_forward.1} parent=1 // pred_fallthru
      _
    // Predicated region
    $region78: #{vae_forward.1} parent=1 // pred_check
      _
    $region79: #{vae_forward.1} parent=1 // pred_check_branch
      %125 = sbr.rel (0) target = $region81
    $region80: #{vae_forward.1} parent=1 // pred_region
      %126 = dma.done [#allocation8], 512
    $region81: #{vae_forward.1} parent=1 // pred_fallthru
      _
    // Predicated region
    $region82: #{vae_forward.1} parent=1 // pred_check
      _
    $region83: #{vae_forward.1} parent=1 // pred_check_branch
      %128 = sbr.rel (0) target = $region85
    $region84: #{vae_forward.1} parent=1 // pred_region
      %129 = dma.done [#allocation11], 512
    $region85: #{vae_forward.1} parent=1 // pred_fallthru
      _
    %v130 = vld [vmem:[#allocation2] sm:$0xff]
    %v131 = vld [vmem:[%s2] sm:$0xff]
    %v132 = vld [vmem:[%s2 + $0x8] sm:$0xff]
    %v133 = vld [vmem:[%s2 + $0x10] sm:$0xff]
    %v134 = vld [vmem:[%s2 + $0x18] sm:$0xff]
    %v135 = vld [vmem:[%s3] sm:$0x1]
    %v137 = vlaneseq
    %v138 = vshrl.u32 %v137, 7
    %v139 = vsub.s32 0, %v138
    %v140 = vrot.slane %v135, %v139
    %vm142 = vcmask 261120
    %v144 = vsel %vm142, %v130, 0
    %146 = vmatprep.subr.mxu0 0.0
    %147 = vmatpush1.msra.mxu0 %v131
    %148 = vmatprep.subr.mxu0 0.0
    %149 = vmatpush1.msra.mxu0 %v132
    %150 = vmatprep.subr.mxu0 0.0
    %151 = vmatpush1.msra.mxu0 %v133
    %152 = vmatprep.subr.mxu0 0.0
    %153 = vmatpush1.msra.mxu0 %v134
    %154 = vmatprep.subr.mxu0 0.0
    %155 = vmatpush1.msra.mxu0 0.0
    %156 = vmatprep.subr.mxu0 0.0
    %157 = vmatpush1.msra.mxu0 0.0
    %158 = vmatprep.subr.mxu0 0.0
    %159 = vmatpush1.msra.mxu0 0.0
    %160 = vmatprep.subr.mxu0 0.0
    %161 = vmatpush1.msra.mxu0 0.0
    %162 = vmatprep.subr.mxu0 0.0
    %163 = vmatpush1.msra.mxu0 0.0
    %164 = vmatprep.subr.mxu0 0.0
    %165 = vmatpush1.msra.mxu0 0.0
    %166 = vmatprep.subr.mxu0 0.0
    %167 = vmatpush1.msra.mxu0 0.0
    %168 = vmatprep.subr.mxu0 0.0
    %169 = vmatpush1.msra.mxu0 0.0
    %170 = vmatprep.subr.mxu0 0.0
    %171 = vmatpush1.msra.mxu0 0.0
    %172 = vmatprep.subr.mxu0 0.0
    %173 = vmatpush1.msra.mxu0 0.0
    %174 = vmatprep.subr.mxu0 0.0
    %175 = vmatpush1.msra.mxu0 0.0
    %176 = vmatprep.subr.mxu0 0.0
    %177 = vmatpush1.msra.mxu0 0.0
    %178 = vmatprep.subr.mxu0 0.0
    %179 = vmatpush1.msra.mxu0 0.0
    %180 = vmatprep.subr.mxu0 0.0
    %181 = vmatpush1.msra.mxu0 0.0
    %182 = vmatprep.subr.mxu0 0.0
    %183 = vmatpush1.msra.mxu0 0.0
    %184 = vmatprep.subr.mxu0 0.0
    %185 = vmatpush1.msra.mxu0 0.0
    %186 = vmatprep.subr.mxu0 0.0
    %187 = vmatpush1.msra.mxu0 0.0
    %188 = vmatprep.subr.mxu0 0.0
    %189 = vmatpush1.msra.mxu0 0.0
    %190 = vmatprep.subr.mxu0 0.0
    %191 = vmatpush1.msra.mxu0 0.0
    %192 = vmatprep.subr.mxu0 0.0
    %193 = vmatpush1.msra.mxu0 0.0
    %194 = vmatprep.subr.mxu0 0.0
    %195 = vmatpush1.msra.mxu0 0.0
    %196 = vmatprep.subr.mxu0 0.0
    %197 = vmatpush1.msra.mxu0 0.0
    %198 = vmatprep.subr.mxu0 0.0
    %199 = vmatpush1.msra.mxu0 0.0
    %200 = vmatprep.subr.mxu0 0.0
    %201 = vmatpush1.msra.mxu0 0.0
    %202 = vmatprep.subr.mxu0 0.0
    %203 = vmatpush1.msra.mxu0 0.0
    %204 = vmatprep.subr.mxu0 0.0
    %205 = vmatpush1.msra.mxu0 0.0
    %206 = vmatprep.subr.mxu0 0.0
    %207 = vmatpush1.msra.mxu0 0.0
    %208 = vmatprep.subr.mxu0 0.0
    %209 = vmatpush1.msra.mxu0 0.0
    %210 = vmatprep.mubr.f32.mxu0 0.0
    %211 = vmatmul.mubr.f32.gmra.mrb[0].mxu0 %v144
    %v212 = vpop.f32.mrb[0].mxu0
    %v213 = vadd.f32 %v140, %v212
    %v214 = vpop.f32.mrb[0].mxu0
    %215 = vdwg.mxu0
    %vm216 = vcmp.gt.f32.partialorder %v213, 0.0
    %v217 = vmul.f32 %v213, 0.2
    %v218 = vsel %vm216, %v213, %v217
    %v219 = vld [vmem:[#allocation4] sm:$0xff]
    %v220 = vld [vmem:[#allocation4 + $0x8] sm:$0xff]
    %v221 = vld [vmem:[#allocation4 + $0x10] sm:$0xff]
    %v222 = vld [vmem:[#allocation4 + $0x18] sm:$0xff]
    %v223 = vld [vmem:[%s5] sm:$0x1]
    %v225 = vlaneseq
    %v226 = vshrl.u32 %v225, 7
    %v227 = vsub.s32 0, %v226
    %v228 = vrot.slane %v223, %v227
    %v231 = vsel %vm142, %v218, 0
    %233 = vmatprep.subr.mxu0 0.0
    %234 = vmatpush1.msra.mxu0 %v219
    %235 = vmatprep.subr.mxu0 0.0
    %236 = vmatpush1.msra.mxu0 %v220
    %237 = vmatprep.subr.mxu0 0.0
    %238 = vmatpush1.msra.mxu0 %v221
    %239 = vmatprep.subr.mxu0 0.0
    %240 = vmatpush1.msra.mxu0 %v222
    %241 = vmatprep.subr.mxu0 0.0
    %242 = vmatpush1.msra.mxu0 0.0
    %243 = vmatprep.subr.mxu0 0.0
    %244 = vmatpush1.msra.mxu0 0.0
    %245 = vmatprep.subr.mxu0 0.0
    %246 = vmatpush1.msra.mxu0 0.0
    %247 = vmatprep.subr.mxu0 0.0
    %248 = vmatpush1.msra.mxu0 0.0
    %249 = vmatprep.subr.mxu0 0.0
    %250 = vmatpush1.msra.mxu0 0.0
    %251 = vmatprep.subr.mxu0 0.0
    %252 = vmatpush1.msra.mxu0 0.0
    %253 = vmatprep.subr.mxu0 0.0
    %254 = vmatpush1.msra.mxu0 0.0
    %255 = vmatprep.subr.mxu0 0.0
    %256 = vmatpush1.msra.mxu0 0.0
    %257 = vmatprep.subr.mxu0 0.0
    %258 = vmatpush1.msra.mxu0 0.0
    %259 = vmatprep.subr.mxu0 0.0
    %260 = vmatpush1.msra.mxu0 0.0
    %261 = vmatprep.subr.mxu0 0.0
    %262 = vmatpush1.msra.mxu0 0.0
    %263 = vmatprep.subr.mxu0 0.0
    %264 = vmatpush1.msra.mxu0 0.0
    %265 = vmatprep.subr.mxu0 0.0
    %266 = vmatpush1.msra.mxu0 0.0
    %267 = vmatprep.subr.mxu0 0.0
    %268 = vmatpush1.msra.mxu0 0.0
    %269 = vmatprep.subr.mxu0 0.0
    %270 = vmatpush1.msra.mxu0 0.0
    %271 = vmatprep.subr.mxu0 0.0
    %272 = vmatpush1.msra.mxu0 0.0
    %273 = vmatprep.subr.mxu0 0.0
    %274 = vmatpush1.msra.mxu0 0.0
    %275 = vmatprep.subr.mxu0 0.0
    %276 = vmatpush1.msra.mxu0 0.0
    %277 = vmatprep.subr.mxu0 0.0
    %278 = vmatpush1.msra.mxu0 0.0
    %279 = vmatprep.subr.mxu0 0.0
    %280 = vmatpush1.msra.mxu0 0.0
    %281 = vmatprep.subr.mxu0 0.0
    %282 = vmatpush1.msra.mxu0 0.0
    %283 = vmatprep.subr.mxu0 0.0
    %284 = vmatpush1.msra.mxu0 0.0
    %285 = vmatprep.subr.mxu0 0.0
    %286 = vmatpush1.msra.mxu0 0.0
    %287 = vmatprep.subr.mxu0 0.0
    %288 = vmatpush1.msra.mxu0 0.0
    %289 = vmatprep.subr.mxu0 0.0
    %290 = vmatpush1.msra.mxu0 0.0
    %291 = vmatprep.subr.mxu0 0.0
    %292 = vmatpush1.msra.mxu0 0.0
    %293 = vmatprep.subr.mxu0 0.0
    %294 = vmatpush1.msra.mxu0 0.0
    %295 = vmatprep.subr.mxu0 0.0
    %296 = vmatpush1.msra.mxu0 0.0
    %297 = vmatprep.mubr.f32.mxu0 0.0
    %298 = vmatmul.mubr.f32.gmra.mrb[0].mxu0 %v231
    %v299 = vpop.f32.mrb[0].mxu0
    %v300 = vadd.f32 %v228, %v299
    %v301 = vpop.f32.mrb[0].mxu0
    %302 = vdwg.mxu0
    %vm303 = vcmp.gt.f32.partialorder %v300, 0.0
    %v304 = vmul.f32 %v300, 0.2
    %v305 = vsel %vm303, %v300, %v304
    %v306 = vld [vmem:[#allocation6] sm:$0xff]
    %v307 = vld [vmem:[#allocation6 + $0x8] sm:$0xff]
    %v308 = vld [vmem:[#allocation6 + $0x10] sm:$0xff]
    %v309 = vld [vmem:[#allocation6 + $0x18] sm:$0xff]
    %v310 = vld [vmem:[%s7] sm:$0x1]
    %v312 = vlaneseq
    %v313 = vshrl.u32 %v312, 7
    %v314 = vsub.s32 0, %v313
    %v315 = vrot.slane %v310, %v314
    %v318 = vsel %vm142, %v305, 0
    %320 = vmatprep.subr.mxu0 0.0
    %321 = vmatpush1.msra.mxu0 %v306
    %322 = vmatprep.subr.mxu0 0.0
    %323 = vmatpush1.msra.mxu0 %v307
    %324 = vmatprep.subr.mxu0 0.0
    %325 = vmatpush1.msra.mxu0 %v308
    %326 = vmatprep.subr.mxu0 0.0
    %327 = vmatpush1.msra.mxu0 %v309
    %328 = vmatprep.subr.mxu0 0.0
    %329 = vmatpush1.msra.mxu0 0.0
    %330 = vmatprep.subr.mxu0 0.0
    %331 = vmatpush1.msra.mxu0 0.0
    %332 = vmatprep.subr.mxu0 0.0
    %333 = vmatpush1.msra.mxu0 0.0
    %334 = vmatprep.subr.mxu0 0.0
    %335 = vmatpush1.msra.mxu0 0.0
    %336 = vmatprep.subr.mxu0 0.0
    %337 = vmatpush1.msra.mxu0 0.0
    %338 = vmatprep.subr.mxu0 0.0
    %339 = vmatpush1.msra.mxu0 0.0
    %340 = vmatprep.subr.mxu0 0.0
    %341 = vmatpush1.msra.mxu0 0.0
    %342 = vmatprep.subr.mxu0 0.0
    %343 = vmatpush1.msra.mxu0 0.0
    %344 = vmatprep.subr.mxu0 0.0
    %345 = vmatpush1.msra.mxu0 0.0
    %346 = vmatprep.subr.mxu0 0.0
    %347 = vmatpush1.msra.mxu0 0.0
    %348 = vmatprep.subr.mxu0 0.0
    %349 = vmatpush1.msra.mxu0 0.0
    %350 = vmatprep.subr.mxu0 0.0
    %351 = vmatpush1.msra.mxu0 0.0
    %352 = vmatprep.subr.mxu0 0.0
    %353 = vmatpush1.msra.mxu0 0.0
    %354 = vmatprep.subr.mxu0 0.0
    %355 = vmatpush1.msra.mxu0 0.0
    %356 = vmatprep.subr.mxu0 0.0
    %357 = vmatpush1.msra.mxu0 0.0
    %358 = vmatprep.subr.mxu0 0.0
    %359 = vmatpush1.msra.mxu0 0.0
    %360 = vmatprep.subr.mxu0 0.0
    %361 = vmatpush1.msra.mxu0 0.0
    %362 = vmatprep.subr.mxu0 0.0
    %363 = vmatpush1.msra.mxu0 0.0
    %364 = vmatprep.subr.mxu0 0.0
    %365 = vmatpush1.msra.mxu0 0.0
    %366 = vmatprep.subr.mxu0 0.0
    %367 = vmatpush1.msra.mxu0 0.0
    %368 = vmatprep.subr.mxu0 0.0
    %369 = vmatpush1.msra.mxu0 0.0
    %370 = vmatprep.subr.mxu0 0.0
    %371 = vmatpush1.msra.mxu0 0.0
    %372 = vmatprep.subr.mxu0 0.0
    %373 = vmatpush1.msra.mxu0 0.0
    %374 = vmatprep.subr.mxu0 0.0
    %375 = vmatpush1.msra.mxu0 0.0
    %376 = vmatprep.subr.mxu0 0.0
    %377 = vmatpush1.msra.mxu0 0.0
    %378 = vmatprep.subr.mxu0 0.0
    %379 = vmatpush1.msra.mxu0 0.0
    %380 = vmatprep.subr.mxu0 0.0
    %381 = vmatpush1.msra.mxu0 0.0
    %382 = vmatprep.subr.mxu0 0.0
    %383 = vmatpush1.msra.mxu0 0.0
    %384 = vmatprep.mubr.f32.mxu0 0.0
    %385 = vmatmul.mubr.f32.gmra.mrb[0].mxu0 %v318
    %v386 = vpop.f32.mrb[0].mxu0
    %v387 = vadd.f32 %v315, %v386
    %v388 = vpop.f32.mrb[0].mxu0
    %389 = vdwg.mxu0
    %v390 = vxor.u32 %v387, 2147483648
    %v391 = vmul.f32 %v390, 1.442695
    %v392 = vpow.pop %v391
    %v393 = vadd.f32 %v392, 1.0
    %v394 = vrcp.pop %v393
    %v395 = vmul.f32 1.0, %v394
    %v396 = vmul.f32 %v387, 0.5
    %v397 = vmul.f32 %v396, 1.442695
    %v398 = vpow.pop %v397
    %v399 = vld [vmem:[%s1] sm:$0xff]
    %401 = vrot.lane.b32.xlu0 %v399, 16
    %v402 = vpop.permute.xlu0 %401
    %v404 = vmul.f32 %v398, %v402
    %406 = vrot.lane.b32.xlu0 %v404, 112
    %v407 = vpop.permute.xlu0 %406
    %v409 = vadd.f32 %v387, %v407
    %v410 = vld [vmem:[#allocation7] sm:$0xff]
    %v411 = vld [vmem:[#allocation7 + $0x8] sm:$0xff]
    %v412 = vld [vmem:[%s9] sm:$0x1]
    %414 = vset.pattern.permute.xlu0 32
    %415 = vperm.xlu0 %414, %v395
    %v416 = vpop.permute.xlu0 %415
    %v419 = vlaneseq
    %v420 = vshrl.u32 %v419, 7
    %v421 = vsub.s32 0, %v420
    %v422 = vrot.slane %v412, %v421
    %v424 = vmul.f32 %v416, %v422
    %vm425 = vcmask 130048
    %v427 = vsel %vm425, %v409, 0
    %429 = vmatprep.subr.mxu0 0.0
    %430 = vmatpush1.msra.mxu0 %v410
    %431 = vmatprep.subr.mxu0 0.0
    %432 = vmatpush1.msra.mxu0 %v411
    %433 = vmatprep.subr.mxu0 0.0
    %434 = vmatpush1.msra.mxu0 0.0
    %435 = vmatprep.subr.mxu0 0.0
    %436 = vmatpush1.msra.mxu0 0.0
    %437 = vmatprep.subr.mxu0 0.0
    %438 = vmatpush1.msra.mxu0 0.0
    %439 = vmatprep.subr.mxu0 0.0
    %440 = vmatpush1.msra.mxu0 0.0
    %441 = vmatprep.subr.mxu0 0.0
    %442 = vmatpush1.msra.mxu0 0.0
    %443 = vmatprep.subr.mxu0 0.0
    %444 = vmatpush1.msra.mxu0 0.0
    %445 = vmatprep.subr.mxu0 0.0
    %446 = vmatpush1.msra.mxu0 0.0
    %447 = vmatprep.subr.mxu0 0.0
    %448 = vmatpush1.msra.mxu0 0.0
    %449 = vmatprep.subr.mxu0 0.0
    %450 = vmatpush1.msra.mxu0 0.0
    %451 = vmatprep.subr.mxu0 0.0
    %452 = vmatpush1.msra.mxu0 0.0
    %453 = vmatprep.subr.mxu0 0.0
    %454 = vmatpush1.msra.mxu0 0.0
    %455 = vmatprep.subr.mxu0 0.0
    %456 = vmatpush1.msra.mxu0 0.0
    %457 = vmatprep.subr.mxu0 0.0
    %458 = vmatpush1.msra.mxu0 0.0
    %459 = vmatprep.subr.mxu0 0.0
    %460 = vmatpush1.msra.mxu0 0.0
    %461 = vmatprep.subr.mxu0 0.0
    %462 = vmatpush1.msra.mxu0 0.0
    %463 = vmatprep.subr.mxu0 0.0
    %464 = vmatpush1.msra.mxu0 0.0
    %465 = vmatprep.subr.mxu0 0.0
    %466 = vmatpush1.msra.mxu0 0.0
    %467 = vmatprep.subr.mxu0 0.0
    %468 = vmatpush1.msra.mxu0 0.0
    %469 = vmatprep.subr.mxu0 0.0
    %470 = vmatpush1.msra.mxu0 0.0
    %471 = vmatprep.subr.mxu0 0.0
    %472 = vmatpush1.msra.mxu0 0.0
    %473 = vmatprep.subr.mxu0 0.0
    %474 = vmatpush1.msra.mxu0 0.0
    %475 = vmatprep.subr.mxu0 0.0
    %476 = vmatpush1.msra.mxu0 0.0
    %477 = vmatprep.subr.mxu0 0.0
    %478 = vmatpush1.msra.mxu0 0.0
    %479 = vmatprep.subr.mxu0 0.0
    %480 = vmatpush1.msra.mxu0 0.0
    %481 = vmatprep.subr.mxu0 0.0
    %482 = vmatpush1.msra.mxu0 0.0
    %483 = vmatprep.subr.mxu0 0.0
    %484 = vmatpush1.msra.mxu0 0.0
    %485 = vmatprep.subr.mxu0 0.0
    %486 = vmatpush1.msra.mxu0 0.0
    %487 = vmatprep.subr.mxu0 0.0
    %488 = vmatpush1.msra.mxu0 0.0
    %489 = vmatprep.subr.mxu0 0.0
    %490 = vmatpush1.msra.mxu0 0.0
    %491 = vmatprep.subr.mxu0 0.0
    %492 = vmatpush1.msra.mxu0 0.0
    %493 = vmatprep.mubr.f32.mxu0 0.0
    %494 = vmatmul.mubr.f32.gmra.mrb[0].mxu0 %v427
    %v495 = vpop.f32.mrb[0].mxu0
    %v496 = vadd.f32 %v424, %v495
    %v497 = vpop.f32.mrb[0].mxu0
    %498 = vdwg.mxu0
    %v499 = vld [vmem:[%s10] sm:$0x1]
    %v501 = vlaneseq
    %v502 = vshrl.u32 %v501, 7
    %v503 = vsub.s32 0, %v502
    %v504 = vrot.slane %v499, %v503
    %v506 = vadd.f32 %v496, %v504
    %vm507 = vcmp.gt.f32.partialorder %v506, 0.0
    %v508 = vmul.f32 %v506, 0.2
    %v509 = vsel %vm507, %v506, %v508
    %v510 = vld [vmem:[#allocation9] sm:$0xff]
    %v511 = vld [vmem:[#allocation9 + $0x8] sm:$0xff]
    %v512 = vld [vmem:[#allocation9 + $0x10] sm:$0xff]
    %v513 = vld [vmem:[#allocation9 + $0x18] sm:$0xff]
    %v514 = vld [vmem:[%s12] sm:$0x1]
    %v516 = vlaneseq
    %v517 = vshrl.u32 %v516, 7
    %v518 = vsub.s32 0, %v517
    %v519 = vrot.slane %v514, %v518
    %v522 = vsel %vm142, %v509, 0
    %524 = vmatprep.subr.mxu0 0.0
    %525 = vmatpush1.msra.mxu0 %v510
    %526 = vmatprep.subr.mxu0 0.0
    %527 = vmatpush1.msra.mxu0 %v511
    %528 = vmatprep.subr.mxu0 0.0
    %529 = vmatpush1.msra.mxu0 %v512
    %530 = vmatprep.subr.mxu0 0.0
    %531 = vmatpush1.msra.mxu0 %v513
    %532 = vmatprep.subr.mxu0 0.0
    %533 = vmatpush1.msra.mxu0 0.0
    %534 = vmatprep.subr.mxu0 0.0
    %535 = vmatpush1.msra.mxu0 0.0
    %536 = vmatprep.subr.mxu0 0.0
    %537 = vmatpush1.msra.mxu0 0.0
    %538 = vmatprep.subr.mxu0 0.0
    %539 = vmatpush1.msra.mxu0 0.0
    %540 = vmatprep.subr.mxu0 0.0
    %541 = vmatpush1.msra.mxu0 0.0
    %542 = vmatprep.subr.mxu0 0.0
    %543 = vmatpush1.msra.mxu0 0.0
    %544 = vmatprep.subr.mxu0 0.0
    %545 = vmatpush1.msra.mxu0 0.0
    %546 = vmatprep.subr.mxu0 0.0
    %547 = vmatpush1.msra.mxu0 0.0
    %548 = vmatprep.subr.mxu0 0.0
    %549 = vmatpush1.msra.mxu0 0.0
    %550 = vmatprep.subr.mxu0 0.0
    %551 = vmatpush1.msra.mxu0 0.0
    %552 = vmatprep.subr.mxu0 0.0
    %553 = vmatpush1.msra.mxu0 0.0
    %554 = vmatprep.subr.mxu0 0.0
    %555 = vmatpush1.msra.mxu0 0.0
    %556 = vmatprep.subr.mxu0 0.0
    %557 = vmatpush1.msra.mxu0 0.0
    %558 = vmatprep.subr.mxu0 0.0
    %559 = vmatpush1.msra.mxu0 0.0
    %560 = vmatprep.subr.mxu0 0.0
    %561 = vmatpush1.msra.mxu0 0.0
    %562 = vmatprep.subr.mxu0 0.0
    %563 = vmatpush1.msra.mxu0 0.0
    %564 = vmatprep.subr.mxu0 0.0
    %565 = vmatpush1.msra.mxu0 0.0
    %566 = vmatprep.subr.mxu0 0.0
    %567 = vmatpush1.msra.mxu0 0.0
    %568 = vmatprep.subr.mxu0 0.0
    %569 = vmatpush1.msra.mxu0 0.0
    %570 = vmatprep.subr.mxu0 0.0
    %571 = vmatpush1.msra.mxu0 0.0
    %572 = vmatprep.subr.mxu0 0.0
    %573 = vmatpush1.msra.mxu0 0.0
    %574 = vmatprep.subr.mxu0 0.0
    %575 = vmatpush1.msra.mxu0 0.0
    %576 = vmatprep.subr.mxu0 0.0
    %577 = vmatpush1.msra.mxu0 0.0
    %578 = vmatprep.subr.mxu0 0.0
    %579 = vmatpush1.msra.mxu0 0.0
    %580 = vmatprep.subr.mxu0 0.0
    %581 = vmatpush1.msra.mxu0 0.0
    %582 = vmatprep.subr.mxu0 0.0
    %583 = vmatpush1.msra.mxu0 0.0
    %584 = vmatprep.subr.mxu0 0.0
    %585 = vmatpush1.msra.mxu0 0.0
    %586 = vmatprep.subr.mxu0 0.0
    %587 = vmatpush1.msra.mxu0 0.0
    %588 = vmatprep.mubr.f32.mxu0 0.0
    %589 = vmatmul.mubr.f32.gmra.mrb[0].mxu0 %v522
    %v590 = vpop.f32.mrb[0].mxu0
    %v591 = vadd.f32 %v519, %v590
    %v592 = vpop.f32.mrb[0].mxu0
    %593 = vdwg.mxu0
    %vm594 = vcmp.gt.f32.partialorder %v591, 0.0
    %v595 = vmul.f32 %v591, 0.2
    %v596 = vsel %vm594, %v591, %v595
    %v597 = vld [vmem:[#allocation10] sm:$0xff]
    %v598 = vld [vmem:[#allocation10 + $0x8] sm:$0xff]
    %v599 = vld [vmem:[#allocation10 + $0x10] sm:$0xff]
    %v600 = vld [vmem:[#allocation10 + $0x18] sm:$0xff]
    %v601 = vld [vmem:[%s14] sm:$0x1]
    %v603 = vlaneseq
    %v604 = vshrl.u32 %v603, 7
    %v605 = vsub.s32 0, %v604
    %v606 = vrot.slane %v601, %v605
    %v609 = vsel %vm142, %v596, 0
    %611 = vmatprep.subr.mxu0 0.0
    %612 = vmatpush1.msra.mxu0 %v597
    %613 = vmatprep.subr.mxu0 0.0
    %614 = vmatpush1.msra.mxu0 %v598
    %615 = vmatprep.subr.mxu0 0.0
    %616 = vmatpush1.msra.mxu0 %v599
    %617 = vmatprep.subr.mxu0 0.0
    %618 = vmatpush1.msra.mxu0 %v600
    %619 = vmatprep.subr.mxu0 0.0
    %620 = vmatpush1.msra.mxu0 0.0
    %621 = vmatprep.subr.mxu0 0.0
    %622 = vmatpush1.msra.mxu0 0.0
    %623 = vmatprep.subr.mxu0 0.0
    %624 = vmatpush1.msra.mxu0 0.0
    %625 = vmatprep.subr.mxu0 0.0
    %626 = vmatpush1.msra.mxu0 0.0
    %627 = vmatprep.subr.mxu0 0.0
    %628 = vmatpush1.msra.mxu0 0.0
    %629 = vmatprep.subr.mxu0 0.0
    %630 = vmatpush1.msra.mxu0 0.0
    %631 = vmatprep.subr.mxu0 0.0
    %632 = vmatpush1.msra.mxu0 0.0
    %633 = vmatprep.subr.mxu0 0.0
    %634 = vmatpush1.msra.mxu0 0.0
    %635 = vmatprep.subr.mxu0 0.0
    %636 = vmatpush1.msra.mxu0 0.0
    %637 = vmatprep.subr.mxu0 0.0
    %638 = vmatpush1.msra.mxu0 0.0
    %639 = vmatprep.subr.mxu0 0.0
    %640 = vmatpush1.msra.mxu0 0.0
    %641 = vmatprep.subr.mxu0 0.0
    %642 = vmatpush1.msra.mxu0 0.0
    %643 = vmatprep.subr.mxu0 0.0
    %644 = vmatpush1.msra.mxu0 0.0
    %645 = vmatprep.subr.mxu0 0.0
    %646 = vmatpush1.msra.mxu0 0.0
    %647 = vmatprep.subr.mxu0 0.0
    %648 = vmatpush1.msra.mxu0 0.0
    %649 = vmatprep.subr.mxu0 0.0
    %650 = vmatpush1.msra.mxu0 0.0
    %651 = vmatprep.subr.mxu0 0.0
    %652 = vmatpush1.msra.mxu0 0.0
    %653 = vmatprep.subr.mxu0 0.0
    %654 = vmatpush1.msra.mxu0 0.0
    %655 = vmatprep.subr.mxu0 0.0
    %656 = vmatpush1.msra.mxu0 0.0
    %657 = vmatprep.subr.mxu0 0.0
    %658 = vmatpush1.msra.mxu0 0.0
    %659 = vmatprep.subr.mxu0 0.0
    %660 = vmatpush1.msra.mxu0 0.0
    %661 = vmatprep.subr.mxu0 0.0
    %662 = vmatpush1.msra.mxu0 0.0
    %663 = vmatprep.subr.mxu0 0.0
    %664 = vmatpush1.msra.mxu0 0.0
    %665 = vmatprep.subr.mxu0 0.0
    %666 = vmatpush1.msra.mxu0 0.0
    %667 = vmatprep.subr.mxu0 0.0
    %668 = vmatpush1.msra.mxu0 0.0
    %669 = vmatprep.subr.mxu0 0.0
    %670 = vmatpush1.msra.mxu0 0.0
    %671 = vmatprep.subr.mxu0 0.0
    %672 = vmatpush1.msra.mxu0 0.0
    %673 = vmatprep.subr.mxu0 0.0
    %674 = vmatpush1.msra.mxu0 0.0
    %675 = vmatprep.mubr.f32.mxu0 0.0
    %676 = vmatmul.mubr.f32.gmra.mrb[0].mxu0 %v609
    %v677 = vpop.f32.mrb[0].mxu0
    %v678 = vadd.f32 %v606, %v677
    %v679 = vpop.f32.mrb[0].mxu0
    %680 = vdwg.mxu0
    %v681 = vxor.u32 %v678, 2147483648
    %v682 = vmul.f32 %v681, 1.442695
    %v683 = vpow.pop %v682
    %v684 = vadd.f32 %v683, 1.0
    %v685 = vrcp.pop %v684
    %v686 = vmul.f32 1.0, %v685
    %vm687 = vcmask 523264
    %688 = vst.msk [vmem:[%s15] sm:$0xff] %vm687, %v387
    %690 = vrot.lane.b32.xlu0 %v686, 64
    %v691 = vpop.permute.xlu0 %690
    %vm693 = vcmask 1048064
    %694 = vst.msk [vmem:[%s15] sm:$0xff] %vm693, %v691
    // Predicated region
    $region86: #{vae_forward.1} parent=1 // pred_check
      _
    $region87: #{vae_forward.1} parent=1 // pred_check_branch
      %696 = sbr.rel (0) target = $region89
    $region88: #{vae_forward.1} parent=1 // pred_region
      _
    $region89: #{vae_forward.1} parent=1 // pred_fallthru
      _
    // Predicated region
    $region90: #{vae_forward.1} parent=1 // pred_check
      _
    $region91: #{vae_forward.1} parent=1 // pred_check_branch
      %698 = sbr.rel (0) target = $region93
    $region92: #{vae_forward.1} parent=1 // pred_region
      _
    $region93: #{vae_forward.1} parent=1 // pred_fallthru
      _
    %699 = vsyncpa [#allocation3], 1
    %700 = vsyncpa [#allocation5], 1
    %701 = vsyncpa [#allocation8], 1
    %702 = vsyncpa [#allocation11], 1

</llo_original>
